<compile_context>
chip_gen: v7x
topology: tpu7x:2x2x1
jax: 0.10.0
libtpu: 0.0.40
codegen_flags: <defaults>
</compile_context>

<pallas_src>
import functools

import jax
import jax.numpy as jnp
from jax.experimental import pallas as pl
from jax.experimental.pallas import tpu as pltpu


def _mlp_kernel(x_ref, w1_ref, b1_ref, w2_ref, b2_ref, w3_ref, b3_ref, ot_ref):
    # x_ref:  (tile_b, D)
    # w1_ref: (H, D)   b1_ref: (H, 1)      -- native PyTorch (out, in) layout
    # w2_ref: (H, H)   b2_ref: (H, 1)
    # w3_ref: (O, H)   b3_ref: (O, 1)
    # ot_ref: (O, tile_b)                  -- transposed (lane-dense) output tile
    x = x_ref[...]
    if x.dtype != w1_ref.dtype:
        # bf16 activations: promote once for the mixed matmul (HBM read of x is
        # already halved; the convert is a cheap VPU pass).
        x = x.astype(w1_ref.dtype)

    # h1^T = relu(W1 @ x^T + b1) : (H, tile_b).  Contract W1 dim 1 with x dim 1
    # (transposed-RHS matmul — same pattern as q @ k^T in attention kernels).
    h1 = jax.lax.dot_general(
        w1_ref[...], x, (((1,), (1,)), ((), ())),
        preferred_element_type=jnp.float32)
    h1 = jnp.maximum(h1 + b1_ref[...], 0.0)

    # h2^T = relu(W2 @ h1^T + b2) : (H, tile_b)
    h2 = jnp.dot(w2_ref[...], h1, preferred_element_type=jnp.float32)
    h2 = jnp.maximum(h2 + b2_ref[...], 0.0)

    # out^T = W3 @ h2^T + b3 : (O, tile_b) — lane-dense store (full 128 lanes).
    out = jnp.dot(w3_ref[...], h2, preferred_element_type=jnp.float32)
    out = out + b3_ref[...]
    ot_ref[...] = out.astype(ot_ref.dtype)


def _pick_tile_b(B):
    # ~512-row tiles reach ~85% of the HBM roofline (vs ~30% at 128) while
    # keeping a multi-step grid so the x tile double-buffers and both v7x
    # TensorCores get work.  Never default to a single (tile_b == B) step for
    # large batches.
    for cand in (512, 1024, 256, 128):
        if cand < B and B % cand == 0:
            return cand
    return B  # tiny batches: block == full array is still legal


def _round_up(n, m):
    return -(-n // m) * m


def _vmem_tile_bytes(rows, cols, dtype):
    """Padded VMEM footprint of one (rows, cols) buffer of `dtype`."""
    itemsize = jnp.dtype(dtype).itemsize
    sublane = max(8, 32 // itemsize)  # 8 for f32, 16 for bf16
    return _round_up(rows, sublane) * _round_up(cols, 128) * itemsize


@functools.partial(jax.jit, static_argnames=("tile_b",))
def mlp_forward(x, w1, b1, w2, b2, w3, b3, *, tile_b=None):
    """x: (B, D). Weights in native PyTorch (out, in) layout, biases (out, 1)."""
    B, D = x.shape
    H = w1.shape[0]
    O = w3.shape[0]

    if tile_b is None:
        tile_b = _pick_tile_b(B)
    assert B % tile_b == 0, "batch must be divisible by tile_b"
    # (8,128) rule: the batch is the sublane dim of the x block AND the lane dim
    # of the (O, tile_b) output block, so tile_b must be a multiple of 128
    # unless it spans the whole batch (block == full array dim is always legal).
    assert tile_b == B or tile_b % 128 == 0, \
        "tile_b must be a multiple of 128 (or equal to the full batch)"
    grid = (B // tile_b,)

    out_dtype = jnp.result_type(x.dtype, w1.dtype)  # f32 for f32 weights

    # Explicit VMEM budget: double-buffered x/out tiles + resident weights +
    # live f32 intermediates, doubled + headroom; well under v7x's 64 MiB.
    est = 2 * _vmem_tile_bytes(tile_b, D, x.dtype)           # x (double-buffered)
    est += 2 * _vmem_tile_bytes(O, tile_b, out_dtype)        # out (double-buffered)
    for p in (w1, b1, w2, b2, w3, b3):
        est += 2 * _vmem_tile_bytes(p.shape[0], p.shape[1], p.dtype)
    est += 2 * _vmem_tile_bytes(H, tile_b, jnp.float32)      # h1/h2 live values
    vmem_limit = int(min(32 * 1024 * 1024, 2 * est + (8 << 20)))

    flops = 2 * B * (D * H + H * H + H * O)
    bytes_accessed = sum(int(a.size) * jnp.dtype(a.dtype).itemsize
                         for a in (x, w1, b1, w2, b2, w3, b3))
    bytes_accessed += B * O * jnp.dtype(out_dtype).itemsize

    out_t = pl.pallas_call(
        _mlp_kernel,
        out_shape=jax.ShapeDtypeStruct((O, B), out_dtype),
        grid_spec=pltpu.PrefetchScalarGridSpec(
            num_scalar_prefetch=0,
            grid=grid,
            in_specs=[
                pl.BlockSpec((tile_b, D), lambda i: (i, 0)),  # x (batch-tiled)
                pl.BlockSpec((H, D), lambda i: (0, 0)),       # w1 (resident)
                pl.BlockSpec((H, 1), lambda i: (0, 0)),       # b1
                pl.BlockSpec((H, H), lambda i: (0, 0)),       # w2
                pl.BlockSpec((H, 1), lambda i: (0, 0)),       # b2
                pl.BlockSpec((O, H), lambda i: (0, 0)),       # w3
                pl.BlockSpec((O, 1), lambda i: (0, 0)),       # b3
            ],
            out_specs=pl.BlockSpec((O, tile_b), lambda i: (0, i)),
        ),
        compiler_params=pltpu.CompilerParams(
            dimension_semantics=("parallel",),
            vmem_limit_bytes=vmem_limit,
        ),
        cost_estimate=pl.CostEstimate(
            flops=flops, transcendentals=0, bytes_accessed=bytes_accessed),
    )(x, w1, b1, w2, b2, w3, b3)

    # (O, B) -> (B, O): a ~8*B-byte transpose outside the kernel (negligible
    # next to the B*D*4-byte x read), keeping the kernel's stores lane-dense.
    return out_t.T


def init_mlp_params(key, inp_dim, hid=32, out_dim=2):
    """PyTorch-style init: U(-1/sqrt(fan_in), 1/sqrt(fan_in)).

    Weights are returned in native PyTorch (out_features, in_features) layout;
    biases as (out_features, 1) columns (they broadcast over the lane/batch dim
    in the kernel's feature-major orientation).
    """
    keys = jax.random.split(key, 6)

    def linear(kw, kb, fan_in, fan_out):
        bound = 1.0 / jnp.sqrt(jnp.float32(fan_in))
        w = jax.random.uniform(kw, (fan_out, fan_in), jnp.float32, -bound, bound)
        b = jax.random.uniform(kb, (fan_out,), jnp.float32, -bound, bound)
        return w, b.reshape(fan_out, 1)

    w1, b1 = linear(keys[0], keys[1], inp_dim, hid)
    w2, b2 = linear(keys[2], keys[3], hid, hid)
    w3, b3 = linear(keys[4], keys[5], hid, out_dim)
    return w1, b1, w2, b2, w3, b3


def mlp_reference(x, w1, b1, w2, b2, w3, b3):
    h1 = jnp.maximum(x @ w1.T + b1[:, 0], 0.0)
    h2 = jnp.maximum(h1 @ w2.T + b2[:, 0], 0.0)
    return h2 @ w3.T + b3[:, 0]


if __name__ == "__main__":
    key = jax.random.PRNGKey(0)
    k_x, k_p = jax.random.split(key)

    B, D, H, O = 1024, 16, 32, 2  # inp_dim=16, hid=32, out=2; tile_b -> 512, grid=(2,)
    x = jax.random.normal(k_x, (B, D), dtype=jnp.float32)
    params = init_mlp_params(k_p, D, hid=H, out_dim=O)

    # f32 path
    out = jax.block_until_ready(mlp_forward(x, *params))
    ref = mlp_reference(x, *params)
    assert out.shape == (B, O)
    assert jnp.allclose(out, ref, atol=1e-5, rtol=1e-5), "f32 mismatch vs reference"

    # bf16 activations: halves the dominant HBM stream (x); f32 accumulation.
    x_bf16 = x.astype(jnp.bfloat16)
    out_bf16 = jax.block_until_ready(mlp_forward(x_bf16, *params))
    ref_bf16 = mlp_reference(x_bf16.astype(jnp.float32), *params)
    assert jnp.allclose(out_bf16, ref_bf16, atol=1e-4, rtol=1e-4), "bf16 mismatch"

    # tiny-batch fallback (tile_b == B, single grid step)
    x_small = jax.random.normal(k_x, (64, D), dtype=jnp.float32)
    out_small = jax.block_until_ready(mlp_forward(x_small, *params))
    ref_small = mlp_reference(x_small, *params)
    assert jnp.allclose(out_small, ref_small, atol=1e-5, rtol=1e-5), "small-batch mismatch"

    print("KERNEL_OK")
</pallas_src>

<mosaic_0001>
module attributes {stable_mosaic.version = 11 : i64} {
  func.func @_mlp_kernel(%arg0: i32, %arg1: memref<512x16xf32, #tpu.memory_space<vmem>>, %arg2: memref<32x16xf32, #tpu.memory_space<vmem>>, %arg3: memref<32x1xf32, #tpu.memory_space<vmem>>, %arg4: memref<32x32xf32, #tpu.memory_space<vmem>>, %arg5: memref<32x1xf32, #tpu.memory_space<vmem>>, %arg6: memref<2x32xf32, #tpu.memory_space<vmem>>, %arg7: memref<2x1xf32, #tpu.memory_space<vmem>>, %arg8: memref<2x512xf32, #tpu.memory_space<vmem>>) attributes {dimension_semantics = [#tpu.dimension_semantics<parallel>], iteration_bounds = array<i64: 2>, scalar_prefetch = 0 : i64, scratch_operands = 0 : i64, tpu.core_type = #tpu.core_type<tc>, window_params = [{transform_indices = @transform_0, window_bounds = array<i64: 512, 16>}, {pipeline_mode = #tpu.pipeline_mode<synchronous>, transform_indices = @transform_1, window_bounds = array<i64: 32, 16>}, {pipeline_mode = #tpu.pipeline_mode<synchronous>, transform_indices = @transform_2, window_bounds = array<i64: 32, 1>}, {pipeline_mode = #tpu.pipeline_mode<synchronous>, transform_indices = @transform_3, window_bounds = array<i64: 32, 32>}, {pipeline_mode = #tpu.pipeline_mode<synchronous>, transform_indices = @transform_4, window_bounds = array<i64: 32, 1>}, {pipeline_mode = #tpu.pipeline_mode<synchronous>, transform_indices = @transform_5, window_bounds = array<i64: 2, 32>}, {pipeline_mode = #tpu.pipeline_mode<synchronous>, transform_indices = @transform_6, window_bounds = array<i64: 2, 1>}, {transform_indices = @transform_7, window_bounds = array<i64: 2, 512>}]} {
    %c0 = arith.constant 0 : index
    %c0_0 = arith.constant 0 : index
    %0 = vector.load %arg1[%c0, %c0_0] : memref<512x16xf32, #tpu.memory_space<vmem>>, vector<512x16xf32>
    %c0_1 = arith.constant 0 : index
    %c0_2 = arith.constant 0 : index
    %1 = vector.load %arg2[%c0_1, %c0_2] : memref<32x16xf32, #tpu.memory_space<vmem>>, vector<32x16xf32>
    %cst = arith.constant dense<0.000000e+00> : vector<32x512xf32>
    %2 = tpu.matmul %1, %0, %cst {dimension_numbers = #tpu.dot_dimension_numbers<[1], [1], [0], [0], [0, 0, 1, 0], [], []>} : vector<32x16xf32>, vector<512x16xf32>, vector<32x512xf32> -> vector<32x512xf32>
    %c0_3 = arith.constant 0 : index
    %c0_4 = arith.constant 0 : index
    %3 = vector.load %arg3[%c0_3, %c0_4] : memref<32x1xf32, #tpu.memory_space<vmem>>, vector<32x1xf32>
    %4 = vector.broadcast %3 : vector<32x1xf32> to vector<32x512xf32>
    %5 = arith.addf %2, %4 : vector<32x512xf32>
    %cst_5 = arith.constant 0.000000e+00 : f32
    %6 = vector.broadcast %cst_5 : f32 to vector<32x512xf32>
    %7 = arith.maximumf %5, %6 : vector<32x512xf32>
    %c0_6 = arith.constant 0 : index
    %c0_7 = arith.constant 0 : index
    %8 = vector.load %arg4[%c0_6, %c0_7] : memref<32x32xf32, #tpu.memory_space<vmem>>, vector<32x32xf32>
    %cst_8 = arith.constant dense<0.000000e+00> : vector<32x512xf32>
    %9 = tpu.matmul %8, %7, %cst_8 {dimension_numbers = #tpu.dot_dimension_numbers<[1], [0], [0], [1], [0, 0, 1, 1], [], []>} : vector<32x32xf32>, vector<32x512xf32>, vector<32x512xf32> -> vector<32x512xf32>
    %c0_9 = arith.constant 0 : index
    %c0_10 = arith.constant 0 : index
    %10 = vector.load %arg5[%c0_9, %c0_10] : memref<32x1xf32, #tpu.memory_space<vmem>>, vector<32x1xf32>
    %11 = vector.broadcast %10 : vector<32x1xf32> to vector<32x512xf32>
    %12 = arith.addf %9, %11 : vector<32x512xf32>
    %cst_11 = arith.constant 0.000000e+00 : f32
    %13 = vector.broadcast %cst_11 : f32 to vector<32x512xf32>
    %14 = arith.maximumf %12, %13 : vector<32x512xf32>
    %c0_12 = arith.constant 0 : index
    %c0_13 = arith.constant 0 : index
    %15 = vector.load %arg6[%c0_12, %c0_13] : memref<2x32xf32, #tpu.memory_space<vmem>>, vector<2x32xf32>
    %cst_14 = arith.constant dense<0.000000e+00> : vector<2x512xf32>
    %16 = tpu.matmul %15, %14, %cst_14 {dimension_numbers = #tpu.dot_dimension_numbers<[1], [0], [0], [1], [0, 0, 1, 1], [], []>} : vector<2x32xf32>, vector<32x512xf32>, vector<2x512xf32> -> vector<2x512xf32>
    %c0_15 = arith.constant 0 : index
    %c0_16 = arith.constant 0 : index
    %17 = vector.load %arg7[%c0_15, %c0_16] : memref<2x1xf32, #tpu.memory_space<vmem>>, vector<2x1xf32>
    %18 = vector.broadcast %17 : vector<2x1xf32> to vector<2x512xf32>
    %19 = arith.addf %16, %18 : vector<2x512xf32>
    %c0_17 = arith.constant 0 : index
    %c0_18 = arith.constant 0 : index
    %20 = vector.load %arg8[%c0_17, %c0_18] : memref<2x512xf32, #tpu.memory_space<vmem>>, vector<2x512xf32>
    tpu.vector_store %arg8[%c0_17, %c0_18], %19 {strides = array<i32>} : memref<2x512xf32, #tpu.memory_space<vmem>>, vector<2x512xf32>,
    return
  }
  func.func @transform_0(%arg0: i32) -> (i32, i32) {
    %c0_i32 = arith.constant 0 : i32
    %c0_i32_0 = arith.constant 0 : i32
    return %arg0, %c0_i32 : i32, i32
  }
  func.func @transform_1(%arg0: i32) -> (i32, i32) {
    %c0_i32 = arith.constant 0 : i32
    %c0_i32_0 = arith.constant 0 : i32
    %c0_i32_1 = arith.constant 0 : i32
    return %c0_i32, %c0_i32_0 : i32, i32
  }
  func.func @transform_2(%arg0: i32) -> (i32, i32) {
    %c0_i32 = arith.constant 0 : i32
    %c0_i32_0 = arith.constant 0 : i32
    %c0_i32_1 = arith.constant 0 : i32
    return %c0_i32, %c0_i32_0 : i32, i32
  }
  func.func @transform_3(%arg0: i32) -> (i32, i32) {
    %c0_i32 = arith.constant 0 : i32
    %c0_i32_0 = arith.constant 0 : i32
    %c0_i32_1 = arith.constant 0 : i32
    return %c0_i32, %c0_i32_0 : i32, i32
  }
  func.func @transform_4(%arg0: i32) -> (i32, i32) {
    %c0_i32 = arith.constant 0 : i32
    %c0_i32_0 = arith.constant 0 : i32
    %c0_i32_1 = arith.constant 0 : i32
    return %c0_i32, %c0_i32_0 : i32, i32
  }
  func.func @transform_5(%arg0: i32) -> (i32, i32) {
    %c0_i32 = arith.constant 0 : i32
    %c0_i32_0 = arith.constant 0 : i32
    %c0_i32_1 = arith.constant 0 : i32
    return %c0_i32, %c0_i32_0 : i32, i32
  }
  func.func @transform_6(%arg0: i32) -> (i32, i32) {
    %c0_i32 = arith.constant 0 : i32
    %c0_i32_0 = arith.constant 0 : i32
    %c0_i32_1 = arith.constant 0 : i32
    return %c0_i32, %c0_i32_0 : i32, i32
  }
  func.func @transform_7(%arg0: i32) -> (i32, i32) {
    %c0_i32 = arith.constant 0 : i32
    %c0_i32_0 = arith.constant 0 : i32
    return %c0_i32, %arg0 : i32, i32
  }
}

</mosaic_0001>

<llo_original>
// kernel: mlp_forward.1
$region0: #{mlp_forward.1}
  #allocation0 [shape = 'u32[]', space=smem, size = 0x4, offset = 0x4, fixed_abs, tag = 'smem constant byte address 0x4 - core index']
  #allocation1 [shape = 'u32[144,128]{1,0:T(1,128)}', space=vmem, size = 0x12000, scoped, tag = 'internal scratch']
  %s0 = inlined_call_operand.vmem [shape: f32[1024,16], index: 0, kind: input, shape index: {}]
  %s1 = inlined_call_operand.vmem [shape: f32[32,16], index: 1, kind: input, shape index: {}]
  %s2 = inlined_call_operand.vmem [shape: f32[32,1], index: 2, kind: input, shape index: {}]
  %s3 = inlined_call_operand.vmem [shape: f32[32,32], index: 3, kind: input, shape index: {}]
  %s4 = inlined_call_operand.vmem [shape: f32[32,1], index: 4, kind: input, shape index: {}]
  %s5 = inlined_call_operand.vmem [shape: f32[2,32], index: 5, kind: input, shape index: {}]
  %s6 = inlined_call_operand.vmem [shape: f32[2,1], index: 6, kind: input, shape index: {}]
  %s7 = inlined_call_operand.hbm [shape: f32[2,1024], index: 7, kind: output, shape index: {}]
  %s8 = sld [smem:[#allocation0]]
  $region61: #{mlp_forward.1} parent=0
    _
  %s10 = ssub.s32 1, %s8
  %s11 = scalar_select 0, %s10, %s8
  $region1: #{mlp_forward.1} parent=0
    #allocation2 [shape = 'u8[8192]{0}', space=vmem, size = 0x2000, scoped, tag = 'output window, operand 0']
    #allocation3 [shape = 's32[2]{0}', space=sflag, size = 0x8, scoped, tag = 'scoped memory for mlp_forward.1']
    %12 = vsyncpa [#allocation3], 0
    %s13 = scalar_lea.sflag [#allocation3], 1
    %14 = vsyncpa %s13, 0
    loop: start=0, step=1, limit=4
    $region2: #{mlp_forward.1} parent=1 // loop_pre_header
      _
    $region3: #{mlp_forward.1} parent=1 // loop_header
      %s16 = sphi 0, %s20
      %p17 = scmp.ge.s32.totalorder %s16, 4
      %s26 = sphi 0, %s28
      %s29 = sphi 0, %s26
      %s30 = sphi 0, %s29
      %s46 = sphi 0, %s30
      %s50 = sphi 0, %s50
      %s52 = sphi 0, %s50
      %s53 = sphi 0, %s52
      %s67 = sphi 0, %s53
      %s71 = sphi 0, %s71
      %s73 = sphi 0, %s71
      %s74 = sphi 0, %s73
      %s88 = sphi 0, %s74
      %s92 = sphi 0, %s92
      %s94 = sphi 0, %s92
      %s95 = sphi 0, %s94
      %s109 = sphi 0, %s95
      %s113 = sphi 0, %s113
      %s115 = sphi 0, %s113
      %s116 = sphi 0, %s115
      %s130 = sphi 0, %s116
      %s134 = sphi 0, %s134
      %s136 = sphi 0, %s134
      %s137 = sphi 0, %s136
      %s151 = sphi 0, %s137
      %s155 = sphi 0, %s155
      %s157 = sphi 0, %s155
      %s158 = sphi 0, %s157
      %s172 = sphi 0, %s158
      %s178 = sphi 0, %s180
      %s181 = sphi 0, %s178
      %s182 = sphi 0, %s181
      %s198 = sphi 0, %s182
    $region4: #{mlp_forward.1} parent=1 // loop_header_branch
      %19 = sbr.rel (%p17) target = $region8
    $region5: #{mlp_forward.1} parent=1 // loop_body
      %s21 = ssub.s32 %s16, 1
      %s22 = ssub.s32 %s16, 2
      %s23 = sadd.s32 %s16, 1
      %s24 = ssub.s32 %s16, %s23
      %p25 = scmp.eq.s32.totalorder %s24, 0
      %s27 = sadd.s32 %s26, 1
      %s28 = scalar_select %p25, %s26, %s27
      %p31 = pneg %p25
      %p32 = scmp.eq.s32.totalorder %s16, 1
      %p33 = por %p31, %p32
      %p34 = scmp.ne.s32.totalorder %s26, %s29
      %p35 = scmp.eq.s32.totalorder %s16, 0
      %p36 = por %p34, %p35
      %p37 = scmp.ne.s32.totalorder %s26, %s29
      %p38 = scmp.eq.s32.totalorder %s21, 1
      %p39 = por %p37, %p38
      %p40 = scmp.ne.s32.totalorder %s29, %s30
      %p41 = scmp.eq.s32.totalorder %s21, 0
      %p42 = por %p40, %p41
      %p43 = scmp.ne.s32.totalorder %s29, %s30
      %p44 = scmp.eq.s32.totalorder %s22, 1
      %p45 = por %p43, %p44
      %p47 = scmp.ne.s32.totalorder %s30, %s46
      %p48 = scmp.eq.s32.totalorder %s22, 0
      %p49 = por %p47, %p48
      %s51 = sadd.s32 %s50, 1
      %p54 = scmp.eq.s32.totalorder %s16, 1
      %p55 = scmp.ne.s32.totalorder %s50, %s52
      %p56 = scmp.eq.s32.totalorder %s16, 0
      %p57 = por %p55, %p56
      %p58 = scmp.ne.s32.totalorder %s50, %s52
      %p59 = scmp.eq.s32.totalorder %s21, 1
      %p60 = por %p58, %p59
      %p61 = scmp.ne.s32.totalorder %s52, %s53
      %p62 = scmp.eq.s32.totalorder %s21, 0
      %p63 = por %p61, %p62
      %p64 = scmp.ne.s32.totalorder %s52, %s53
      %p65 = scmp.eq.s32.totalorder %s22, 1
      %p66 = por %p64, %p65
      %p68 = scmp.ne.s32.totalorder %s53, %s67
      %p69 = scmp.eq.s32.totalorder %s22, 0
      %p70 = por %p68, %p69
      %s72 = sadd.s32 %s71, 1
      %p75 = scmp.eq.s32.totalorder %s16, 1
      %p76 = scmp.ne.s32.totalorder %s71, %s73
      %p77 = scmp.eq.s32.totalorder %s16, 0
      %p78 = por %p76, %p77
      %p79 = scmp.ne.s32.totalorder %s71, %s73
      %p80 = scmp.eq.s32.totalorder %s21, 1
      %p81 = por %p79, %p80
      %p82 = scmp.ne.s32.totalorder %s73, %s74
      %p83 = scmp.eq.s32.totalorder %s21, 0
      %p84 = por %p82, %p83
      %p85 = scmp.ne.s32.totalorder %s73, %s74
      %p86 = scmp.eq.s32.totalorder %s22, 1
      %p87 = por %p85, %p86
      %p89 = scmp.ne.s32.totalorder %s74, %s88
      %p90 = scmp.eq.s32.totalorder %s22, 0
      %p91 = por %p89, %p90
      %s93 = sadd.s32 %s92, 1
      %p96 = scmp.eq.s32.totalorder %s16, 1
      %p97 = scmp.ne.s32.totalorder %s92, %s94
      %p98 = scmp.eq.s32.totalorder %s16, 0
      %p99 = por %p97, %p98
      %p100 = scmp.ne.s32.totalorder %s92, %s94
      %p101 = scmp.eq.s32.totalorder %s21, 1
      %p102 = por %p100, %p101
      %p103 = scmp.ne.s32.totalorder %s94, %s95
      %p104 = scmp.eq.s32.totalorder %s21, 0
      %p105 = por %p103, %p104
      %p106 = scmp.ne.s32.totalorder %s94, %s95
      %p107 = scmp.eq.s32.totalorder %s22, 1
      %p108 = por %p106, %p107
      %p110 = scmp.ne.s32.totalorder %s95, %s109
      %p111 = scmp.eq.s32.totalorder %s22, 0
      %p112 = por %p110, %p111
      %s114 = sadd.s32 %s113, 1
      %p117 = scmp.eq.s32.totalorder %s16, 1
      %p118 = scmp.ne.s32.totalorder %s113, %s115
      %p119 = scmp.eq.s32.totalorder %s16, 0
      %p120 = por %p118, %p119
      %p121 = scmp.ne.s32.totalorder %s113, %s115
      %p122 = scmp.eq.s32.totalorder %s21, 1
      %p123 = por %p121, %p122
      %p124 = scmp.ne.s32.totalorder %s115, %s116
      %p125 = scmp.eq.s32.totalorder %s21, 0
      %p126 = por %p124, %p125
      %p127 = scmp.ne.s32.totalorder %s115, %s116
      %p128 = scmp.eq.s32.totalorder %s22, 1
      %p129 = por %p127, %p128
      %p131 = scmp.ne.s32.totalorder %s116, %s130
      %p132 = scmp.eq.s32.totalorder %s22, 0
      %p133 = por %p131, %p132
      %s135 = sadd.s32 %s134, 1
      %p138 = scmp.eq.s32.totalorder %s16, 1
      %p139 = scmp.ne.s32.totalorder %s134, %s136
      %p140 = scmp.eq.s32.totalorder %s16, 0
      %p141 = por %p139, %p140
      %p142 = scmp.ne.s32.totalorder %s134, %s136
      %p143 = scmp.eq.s32.totalorder %s21, 1
      %p144 = por %p142, %p143
      %p145 = scmp.ne.s32.totalorder %s136, %s137
      %p146 = scmp.eq.s32.totalorder %s21, 0
      %p147 = por %p145, %p146
      %p148 = scmp.ne.s32.totalorder %s136, %s137
      %p149 = scmp.eq.s32.totalorder %s22, 1
      %p150 = por %p148, %p149
      %p152 = scmp.ne.s32.totalorder %s137, %s151
      %p153 = scmp.eq.s32.totalorder %s22, 0
      %p154 = por %p152, %p153
      %s156 = sadd.s32 %s155, 1
      %p159 = scmp.eq.s32.totalorder %s16, 1
      %p160 = scmp.ne.s32.totalorder %s155, %s157
      %p161 = scmp.eq.s32.totalorder %s16, 0
      %p162 = por %p160, %p161
      %p163 = scmp.ne.s32.totalorder %s155, %s157
      %p164 = scmp.eq.s32.totalorder %s21, 1
      %p165 = por %p163, %p164
      %p166 = scmp.ne.s32.totalorder %s157, %s158
      %p167 = scmp.eq.s32.totalorder %s21, 0
      %p168 = por %p166, %p167
      %p169 = scmp.ne.s32.totalorder %s157, %s158
      %p170 = scmp.eq.s32.totalorder %s22, 1
      %p171 = por %p169, %p170
      %p173 = scmp.ne.s32.totalorder %s158, %s172
      %p174 = scmp.eq.s32.totalorder %s22, 0
      %p175 = por %p173, %p174
      %s176 = ssub.s32 %s16, %s23
      %p177 = scmp.eq.s32.totalorder %s176, 0
      %s179 = sadd.s32 %s178, 1
      %s180 = scalar_select %p177, %s178, %s179
      %p183 = pneg %p177
      %p184 = scmp.eq.s32.totalorder %s16, 1
      %p185 = por %p183, %p184
      %p186 = scmp.ne.s32.totalorder %s178, %s181
      %p187 = scmp.eq.s32.totalorder %s16, 0
      %p188 = por %p186, %p187
      %p189 = scmp.ne.s32.totalorder %s178, %s181
      %p190 = scmp.eq.s32.totalorder %s21, 1
      %p191 = por %p189, %p190
      %p192 = scmp.ne.s32.totalorder %s181, %s182
      %p193 = scmp.eq.s32.totalorder %s21, 0
      %p194 = por %p192, %p193
      %p195 = scmp.ne.s32.totalorder %s181, %s182
      %p196 = scmp.eq.s32.totalorder %s22, 1
      %p197 = por %p195, %p196
      %p199 = scmp.ne.s32.totalorder %s182, %s198
      %p200 = scmp.eq.s32.totalorder %s22, 0
      %p201 = por %p199, %p200
      %p202 = scmp.le.s32.totalorder 1, %s16
      %p203 = scmp.lt.s32.totalorder %s16, 3
      %p204 = pnand %p202, %p203
      %p205 = pneg %p204
      // Predicated region
      $region9: #{mlp_forward.1} parent=5 // pred_check
        _
      $region10: #{mlp_forward.1} parent=5 // pred_check_branch
        %207 = sbr.rel (%p204) target = $region12
      $region11: #{mlp_forward.1} parent=5 // pred_region
        %s208 = ssub.s32 %s16, 1
        // Predicated region
        $region13: #{mlp_forward.1} parent=11 // pred_check
          %p209 = pneg %p63
        $region14: #{mlp_forward.1} parent=11 // pred_check_branch
          %211 = sbr.rel (%p209) target = $region16
        $region15: #{mlp_forward.1} parent=11 // pred_region
          _
        $region16: #{mlp_forward.1} parent=11 // pred_fallthru
          _
        // Predicated region
        $region17: #{mlp_forward.1} parent=11 // pred_check
          %p212 = pneg %p84
        $region18: #{mlp_forward.1} parent=11 // pred_check_branch
          %214 = sbr.rel (%p212) target = $region20
        $region19: #{mlp_forward.1} parent=11 // pred_region
          _
        $region20: #{mlp_forward.1} parent=11 // pred_fallthru
          _
        // Predicated region
        $region21: #{mlp_forward.1} parent=11 // pred_check
          %p215 = pneg %p105
        $region22: #{mlp_forward.1} parent=11 // pred_check_branch
          %217 = sbr.rel (%p215) target = $region24
        $region23: #{mlp_forward.1} parent=11 // pred_region
          _
        $region24: #{mlp_forward.1} parent=11 // pred_fallthru
          _
        // Predicated region
        $region25: #{mlp_forward.1} parent=11 // pred_check
          %p218 = pneg %p126
        $region26: #{mlp_forward.1} parent=11 // pred_check_branch
          %220 = sbr.rel (%p218) target = $region28
        $region27: #{mlp_forward.1} parent=11 // pred_region
          _
        $region28: #{mlp_forward.1} parent=11 // pred_fallthru
          _
        // Predicated region
        $region29: #{mlp_forward.1} parent=11 // pred_check
          %p221 = pneg %p147
        $region30: #{mlp_forward.1} parent=11 // pred_check_branch
          %223 = sbr.rel (%p221) target = $region32
        $region31: #{mlp_forward.1} parent=11 // pred_region
          _
        $region32: #{mlp_forward.1} parent=11 // pred_fallthru
          _
        // Predicated region
        $region33: #{mlp_forward.1} parent=11 // pred_check
          %p224 = pneg %p168
        $region34: #{mlp_forward.1} parent=11 // pred_check_branch
          %226 = sbr.rel (%p224) target = $region36
        $region35: #{mlp_forward.1} parent=11 // pred_region
          _
        $region36: #{mlp_forward.1} parent=11 // pred_fallthru
          _
      $region12: #{mlp_forward.1} parent=5 // pred_fallthru
        _
      %p227 = scmp.lt.s32.totalorder %s16, 2
      // Predicated region
      $region37: #{mlp_forward.1} parent=5 // pred_check
        %p228 = pneg %p227
      $region38: #{mlp_forward.1} parent=5 // pred_check_branch
        %230 = sbr.rel (%p228) target = $region40
      $region39: #{mlp_forward.1} parent=5 // pred_region
        // Predicated region
        $region41: #{mlp_forward.1} parent=39 // pred_check
          %p231 = pneg %p36
        $region42: #{mlp_forward.1} parent=39 // pred_check_branch
          %233 = sbr.rel (%p231) target = $region44
        $region43: #{mlp_forward.1} parent=39 // pred_region
          %s234 = smul.u32 64, %s16
          %p235 = scmp.lt.s32.totalorder %s234, 127
          %s236 = scalar_select %p235, %s234, 127
          %s237 = smul.addr %s236, 8
          %s238 = scalar_lea.vmem %s0, %s237
          %s239 = smul.u32 64, %s16
        $region44: #{mlp_forward.1} parent=39 // pred_fallthru
          _
      $region40: #{mlp_forward.1} parent=5 // pred_fallthru
        _
      %p240 = scmp.le.s32.totalorder 1, %s16
      %p241 = scmp.lt.s32.totalorder %s16, 3
      %p242 = pnand %p240, %p241
      %p243 = pneg %p242
      // Predicated region
      $region45: #{mlp_forward.1} parent=5 // pred_check
        _
      $region46: #{mlp_forward.1} parent=5 // pred_check_branch
        %245 = sbr.rel (%p242) target = $region48
      $region47: #{mlp_forward.1} parent=5 // pred_region
        %s246 = ssub.s32 %s16, 1
        %s247 = smul.u32 64, %s21
        %p248 = scmp.lt.s32.totalorder %s247, 127
        %s249 = scalar_select %p248, %s247, 127
        %s250 = smul.addr %s249, 8
        %s251 = scalar_lea.vmem %s0, %s250
        %p252 = pneg %p42
        %p253 = pneg %p39
        %p254 = pneg %p63
        %p255 = pneg %p60
        %p256 = pneg %p84
        %p257 = pneg %p81
        %p258 = pneg %p105
        %p259 = pneg %p102
        %p260 = pneg %p126
        %p261 = pneg %p123
        %p262 = pneg %p147
        %p263 = pneg %p144
        %p264 = pneg %p168
        %p265 = pneg %p165
        %p266 = pneg %p194
        %p267 = pneg %p191
        %s268 = sand.u32 %s181, 1
        %s269 = scalar_lea.sflag [#allocation3], %s268
        %s270 = sand.u32 %s181, 1
        %s271 = smul.addr %s270, 8
        %s272 = scalar_lea.vmem [#allocation2], %s271
        %s273 = smul.u32 64, %s21
        %p274 = scmp.lt.s32.totalorder %s273, 127
        %s275 = scalar_select %p274, %s273, 127
        %s276 = smul.addr %s275, 8
        %s277 = scalar_lea.vmem %s0, %s276
        %s278 = smul.u32 64, %s21
        %s279 = smul.u32 4, %s21
        %v280 = vld [vmem:[%s277] sm:$0xff]
        %v281 = vld [vmem:[%s277 + $0x8] sm:$0xff]
        %v282 = vld [vmem:[%s277 + $0x10] sm:$0xff]
        %v283 = vld [vmem:[%s277 + $0x18] sm:$0xff]
        %v284 = vld [vmem:[%s277 + $0x20] sm:$0xff]
        %v285 = vld [vmem:[%s277 + $0x28] sm:$0xff]
        %v286 = vld [vmem:[%s277 + $0x30] sm:$0xff]
        %v287 = vld [vmem:[%s277 + $0x38] sm:$0xff]
        %v288 = vld [vmem:[%s277 + $0x40] sm:$0xff]
        %v289 = vld [vmem:[%s277 + $0x48] sm:$0xff]
        %v290 = vld [vmem:[%s277 + $0x50] sm:$0xff]
        %v291 = vld [vmem:[%s277 + $0x58] sm:$0xff]
        %v292 = vld [vmem:[%s277 + $0x60] sm:$0xff]
        %v293 = vld [vmem:[%s277 + $0x68] sm:$0xff]
        %v294 = vld [vmem:[%s277 + $0x70] sm:$0xff]
        %v295 = vld [vmem:[%s277 + $0x78] sm:$0xff]
        %v296 = vld [vmem:[%s277 + $0x80] sm:$0xff]
        %v297 = vld [vmem:[%s277 + $0x88] sm:$0xff]
        %v298 = vld [vmem:[%s277 + $0x90] sm:$0xff]
        %v299 = vld [vmem:[%s277 + $0x98] sm:$0xff]
        %v300 = vld [vmem:[%s277 + $0xa0] sm:$0xff]
        %v301 = vld [vmem:[%s277 + $0xa8] sm:$0xff]
        %v302 = vld [vmem:[%s277 + $0xb0] sm:$0xff]
        %v303 = vld [vmem:[%s277 + $0xb8] sm:$0xff]
        %v304 = vld [vmem:[%s277 + $0xc0] sm:$0xff]
        %v305 = vld [vmem:[%s277 + $0xc8] sm:$0xff]
        %v306 = vld [vmem:[%s277 + $0xd0] sm:$0xff]
        %v307 = vld [vmem:[%s277 + $0xd8] sm:$0xff]
        %v308 = vld [vmem:[%s277 + $0xe0] sm:$0xff]
        %v309 = vld [vmem:[%s277 + $0xe8] sm:$0xff]
        %v310 = vld [vmem:[%s277 + $0xf0] sm:$0xff]
        %v311 = vld [vmem:[%s277 + $0xf8] sm:$0xff]
        %v312 = vld [vmem:[%s277 + $0x100] sm:$0xff]
        %v313 = vld [vmem:[%s277 + $0x108] sm:$0xff]
        %v314 = vld [vmem:[%s277 + $0x110] sm:$0xff]
        %v315 = vld [vmem:[%s277 + $0x118] sm:$0xff]
        %v316 = vld [vmem:[%s277 + $0x120] sm:$0xff]
        %v317 = vld [vmem:[%s277 + $0x128] sm:$0xff]
        %v318 = vld [vmem:[%s277 + $0x130] sm:$0xff]
        %v319 = vld [vmem:[%s277 + $0x138] sm:$0xff]
        %v320 = vld [vmem:[%s277 + $0x140] sm:$0xff]
        %v321 = vld [vmem:[%s277 + $0x148] sm:$0xff]
        %v322 = vld [vmem:[%s277 + $0x150] sm:$0xff]
        %v323 = vld [vmem:[%s277 + $0x158] sm:$0xff]
        %v324 = vld [vmem:[%s277 + $0x160] sm:$0xff]
        %v325 = vld [vmem:[%s277 + $0x168] sm:$0xff]
        %v326 = vld [vmem:[%s277 + $0x170] sm:$0xff]
        %v327 = vld [vmem:[%s277 + $0x178] sm:$0xff]
        %v328 = vld [vmem:[%s277 + $0x180] sm:$0xff]
        %v329 = vld [vmem:[%s277 + $0x188] sm:$0xff]
        %v330 = vld [vmem:[%s277 + $0x190] sm:$0xff]
        %v331 = vld [vmem:[%s277 + $0x198] sm:$0xff]
        %v332 = vld [vmem:[%s277 + $0x1a0] sm:$0xff]
        %v333 = vld [vmem:[%s277 + $0x1a8] sm:$0xff]
        %v334 = vld [vmem:[%s277 + $0x1b0] sm:$0xff]
        %v335 = vld [vmem:[%s277 + $0x1b8] sm:$0xff]
        %v336 = vld [vmem:[%s277 + $0x1c0] sm:$0xff]
        %v337 = vld [vmem:[%s277 + $0x1c8] sm:$0xff]
        %v338 = vld [vmem:[%s277 + $0x1d0] sm:$0xff]
        %v339 = vld [vmem:[%s277 + $0x1d8] sm:$0xff]
        %v340 = vld [vmem:[%s277 + $0x1e0] sm:$0xff]
        %v341 = vld [vmem:[%s277 + $0x1e8] sm:$0xff]
        %v342 = vld [vmem:[%s277 + $0x1f0] sm:$0xff]
        %v343 = vld [vmem:[%s277 + $0x1f8] sm:$0xff]
        %v344 = vld [vmem:[%s1] sm:$0xff]
        %v345 = vld [vmem:[%s1 + $0x8] sm:$0xff]
        %v346 = vld [vmem:[%s1 + $0x10] sm:$0xff]
        %v347 = vld [vmem:[%s1 + $0x18] sm:$0xff]
        %v348 = vld [vmem:[%s2] sm:$0xff]
        %v349 = vld [vmem:[%s2 + $0x8] sm:$0xff]
        %v350 = vld [vmem:[%s2 + $0x10] sm:$0xff]
        %v351 = vld [vmem:[%s2 + $0x18] sm:$0xff]
        %353 = vset.pattern.permute.xlu0 0
        %354 = vperm.xlu0 %353, %v348
        %v355 = vpop.permute.xlu0 %354
        %358 = vset.pattern.permute.xlu0 0
        %359 = vperm.xlu0 %358, %v349
        %v360 = vpop.permute.xlu0 %359
        %363 = vset.pattern.permute.xlu0 0
        %364 = vperm.xlu0 %363, %v350
        %v365 = vpop.permute.xlu0 %364
        %368 = vset.pattern.permute.xlu0 0
        %369 = vperm.xlu0 %368, %v351
        %v370 = vpop.permute.xlu0 %369
        %vm372 = vcmask 130048
        %v374 = vsel %vm372, %v344, 0
        %v377 = vsel %vm372, %v345, 0
        %v380 = vsel %vm372, %v346, 0
        %v383 = vsel %vm372, %v347, 0
        %v386 = vsel %vm372, %v280, 0
        %v389 = vsel %vm372, %v281, 0
        %v392 = vsel %vm372, %v282, 0
        %v395 = vsel %vm372, %v283, 0
        %v398 = vsel %vm372, %v284, 0
        %v401 = vsel %vm372, %v285, 0
        %v404 = vsel %vm372, %v286, 0
        %v407 = vsel %vm372, %v287, 0
        %v410 = vsel %vm372, %v288, 0
        %v413 = vsel %vm372, %v289, 0
        %v416 = vsel %vm372, %v290, 0
        %v419 = vsel %vm372, %v291, 0
        %v422 = vsel %vm372, %v292, 0
        %v425 = vsel %vm372, %v293, 0
        %v428 = vsel %vm372, %v294, 0
        %v431 = vsel %vm372, %v295, 0
        %v434 = vsel %vm372, %v296, 0
        %v437 = vsel %vm372, %v297, 0
        %v440 = vsel %vm372, %v298, 0
        %v443 = vsel %vm372, %v299, 0
        %v446 = vsel %vm372, %v300, 0
        %v449 = vsel %vm372, %v301, 0
        %v452 = vsel %vm372, %v302, 0
        %v455 = vsel %vm372, %v303, 0
        %v458 = vsel %vm372, %v304, 0
        %v461 = vsel %vm372, %v305, 0
        %v464 = vsel %vm372, %v306, 0
        %v467 = vsel %vm372, %v307, 0
        %v470 = vsel %vm372, %v308, 0
        %v473 = vsel %vm372, %v309, 0
        %v476 = vsel %vm372, %v310, 0
        %v479 = vsel %vm372, %v311, 0
        %v482 = vsel %vm372, %v312, 0
        %v485 = vsel %vm372, %v313, 0
        %v488 = vsel %vm372, %v314, 0
        %v491 = vsel %vm372, %v315, 0
        %v494 = vsel %vm372, %v316, 0
        %v497 = vsel %vm372, %v317, 0
        %v500 = vsel %vm372, %v318, 0
        %v503 = vsel %vm372, %v319, 0
        %v506 = vsel %vm372, %v320, 0
        %v509 = vsel %vm372, %v321, 0
        %v512 = vsel %vm372, %v322, 0
        %v515 = vsel %vm372, %v323, 0
        %v518 = vsel %vm372, %v324, 0
        %v521 = vsel %vm372, %v325, 0
        %v524 = vsel %vm372, %v326, 0
        %v527 = vsel %vm372, %v327, 0
        %v530 = vsel %vm372, %v328, 0
        %v533 = vsel %vm372, %v329, 0
        %v536 = vsel %vm372, %v330, 0
        %v539 = vsel %vm372, %v331, 0
        %v542 = vsel %vm372, %v332, 0
        %v545 = vsel %vm372, %v333, 0
        %v548 = vsel %vm372, %v334, 0
        %v551 = vsel %vm372, %v335, 0
        %v554 = vsel %vm372, %v336, 0
        %v557 = vsel %vm372, %v337, 0
        %v560 = vsel %vm372, %v338, 0
        %v563 = vsel %vm372, %v339, 0
        %v566 = vsel %vm372, %v340, 0
        %v569 = vsel %vm372, %v341, 0
        %v572 = vsel %vm372, %v342, 0
        %v575 = vsel %vm372, %v343, 0
        %577 = vmatprep.subr.mxu0 0.0
        %578 = vmatpush1.xpose.msra.mxu0 %v386
        %579 = vmatprep.subr.mxu0 0.0
        %580 = vmatpush1.xpose.msra.mxu0 %v389
        %581 = vmatprep.subr.mxu0 0.0
        %582 = vmatpush1.xpose.msra.mxu0 %v392
        %583 = vmatprep.subr.mxu0 0.0
        %584 = vmatpush1.xpose.msra.mxu0 %v395
        %585 = vmatprep.subr.mxu0 0.0
        %586 = vmatpush1.xpose.msra.mxu0 %v398
        %587 = vmatprep.subr.mxu0 0.0
        %588 = vmatpush1.xpose.msra.mxu0 %v401
        %589 = vmatprep.subr.mxu0 0.0
        %590 = vmatpush1.xpose.msra.mxu0 %v404
        %591 = vmatprep.subr.mxu0 0.0
        %592 = vmatpush1.xpose.msra.mxu0 %v407
        %593 = vmatprep.subr.mxu0 0.0
        %594 = vmatpush1.xpose.msra.mxu0 %v410
        %595 = vmatprep.subr.mxu0 0.0
        %596 = vmatpush1.xpose.msra.mxu0 %v413
        %597 = vmatprep.subr.mxu0 0.0
        %598 = vmatpush1.xpose.msra.mxu0 %v416
        %599 = vmatprep.subr.mxu0 0.0
        %600 = vmatpush1.xpose.msra.mxu0 %v419
        %601 = vmatprep.subr.mxu0 0.0
        %602 = vmatpush1.xpose.msra.mxu0 %v422
        %603 = vmatprep.subr.mxu0 0.0
        %604 = vmatpush1.xpose.msra.mxu0 %v425
        %605 = vmatprep.subr.mxu0 0.0
        %606 = vmatpush1.xpose.msra.mxu0 %v428
        %607 = vmatprep.subr.mxu0 0.0
        %608 = vmatpush1.xpose.msra.mxu0 %v431
        %609 = vmatprep.subr.mxu0 0.0
        %610 = vmatpush1.xpose.msra.mxu0 %v434
        %611 = vmatprep.subr.mxu0 0.0
        %612 = vmatpush1.xpose.msra.mxu0 %v437
        %613 = vmatprep.subr.mxu0 0.0
        %614 = vmatpush1.xpose.msra.mxu0 %v440
        %615 = vmatprep.subr.mxu0 0.0
        %616 = vmatpush1.xpose.msra.mxu0 %v443
        %617 = vmatprep.subr.mxu0 0.0
        %618 = vmatpush1.xpose.msra.mxu0 %v446
        %619 = vmatprep.subr.mxu0 0.0
        %620 = vmatpush1.xpose.msra.mxu0 %v449
        %621 = vmatprep.subr.mxu0 0.0
        %622 = vmatpush1.xpose.msra.mxu0 %v452
        %623 = vmatprep.subr.mxu0 0.0
        %624 = vmatpush1.xpose.msra.mxu0 %v455
        %625 = vmatprep.subr.mxu0 0.0
        %626 = vmatpush1.xpose.msra.mxu0 %v458
        %627 = vmatprep.subr.mxu0 0.0
        %628 = vmatpush1.xpose.msra.mxu0 %v461
        %629 = vmatprep.subr.mxu0 0.0
        %630 = vmatpush1.xpose.msra.mxu0 %v464
        %631 = vmatprep.subr.mxu0 0.0
        %632 = vmatpush1.xpose.msra.mxu0 %v467
        %633 = vmatprep.subr.mxu0 0.0
        %634 = vmatpush1.xpose.msra.mxu0 %v470
        %635 = vmatprep.subr.mxu0 0.0
        %636 = vmatpush1.xpose.msra.mxu0 %v473
        %637 = vmatprep.subr.mxu0 0.0
        %638 = vmatpush1.xpose.msra.mxu0 %v476
        %639 = vmatprep.subr.mxu0 0.0
        %640 = vmatpush1.xpose.msra.mxu0 %v479
        %641 = vmatprep.mubr.f32.mxu0 0.0
        %642 = vmatmul.mubr.f32.gmra.mrb[0].mxu0 %v374
        %v643 = vpop.f32.mrb[0].mxu0
        %v644 = vadd.f32 %v355, %v643
        %v645 = vpop.f32.mrb[0].mxu0
        %v646 = vadd.f32 %v355, %v645
        %647 = vmatprep.mubr.f32.mxu0 0.0
        %648 = vmatmul.mubr.f32.gmra.mrb[0].mxu0 %v377
        %v649 = vpop.f32.mrb[0].mxu0
        %v650 = vadd.f32 %v360, %v649
        %v651 = vpop.f32.mrb[0].mxu0
        %v652 = vadd.f32 %v360, %v651
        %653 = vmatprep.mubr.f32.mxu0 0.0
        %654 = vmatmul.mubr.f32.gmra.mrb[0].mxu0 %v380
        %v655 = vpop.f32.mrb[0].mxu0
        %v656 = vadd.f32 %v365, %v655
        %v657 = vpop.f32.mrb[0].mxu0
        %v658 = vadd.f32 %v365, %v657
        %659 = vmatprep.mubr.f32.mxu0 0.0
        %660 = vmatmul.mubr.f32.gmra.mrb[0].mxu0 %v383
        %v661 = vpop.f32.mrb[0].mxu0
        %v662 = vadd.f32 %v370, %v661
        %v663 = vpop.f32.mrb[0].mxu0
        %v664 = vadd.f32 %v370, %v663
        %665 = vdwg.mxu0
        %666 = vmatprep.subr.mxu0 0.0
        %667 = vmatpush1.xpose.msra.mxu0 %v482
        %668 = vmatprep.subr.mxu0 0.0
        %669 = vmatpush1.xpose.msra.mxu0 %v485
        %670 = vmatprep.subr.mxu0 0.0
        %671 = vmatpush1.xpose.msra.mxu0 %v488
        %672 = vmatprep.subr.mxu0 0.0
        %673 = vmatpush1.xpose.msra.mxu0 %v491
        %674 = vmatprep.subr.mxu0 0.0
        %675 = vmatpush1.xpose.msra.mxu0 %v494
        %676 = vmatprep.subr.mxu0 0.0
        %677 = vmatpush1.xpose.msra.mxu0 %v497
        %678 = vmatprep.subr.mxu0 0.0
        %679 = vmatpush1.xpose.msra.mxu0 %v500
        %680 = vmatprep.subr.mxu0 0.0
        %681 = vmatpush1.xpose.msra.mxu0 %v503
        %682 = vmatprep.subr.mxu0 0.0
        %683 = vmatpush1.xpose.msra.mxu0 %v506
        %684 = vmatprep.subr.mxu0 0.0
        %685 = vmatpush1.xpose.msra.mxu0 %v509
        %686 = vmatprep.subr.mxu0 0.0
        %687 = vmatpush1.xpose.msra.mxu0 %v512
        %688 = vmatprep.subr.mxu0 0.0
        %689 = vmatpush1.xpose.msra.mxu0 %v515
        %690 = vmatprep.subr.mxu0 0.0
        %691 = vmatpush1.xpose.msra.mxu0 %v518
        %692 = vmatprep.subr.mxu0 0.0
        %693 = vmatpush1.xpose.msra.mxu0 %v521
        %694 = vmatprep.subr.mxu0 0.0
        %695 = vmatpush1.xpose.msra.mxu0 %v524
        %696 = vmatprep.subr.mxu0 0.0
        %697 = vmatpush1.xpose.msra.mxu0 %v527
        %698 = vmatprep.subr.mxu0 0.0
        %699 = vmatpush1.xpose.msra.mxu0 %v530
        %700 = vmatprep.subr.mxu0 0.0
        %701 = vmatpush1.xpose.msra.mxu0 %v533
        %702 = vmatprep.subr.mxu0 0.0
        %703 = vmatpush1.xpose.msra.mxu0 %v536
        %704 = vmatprep.subr.mxu0 0.0
        %705 = vmatpush1.xpose.msra.mxu0 %v539
        %706 = vmatprep.subr.mxu0 0.0
        %707 = vmatpush1.xpose.msra.mxu0 %v542
        %708 = vmatprep.subr.mxu0 0.0
        %709 = vmatpush1.xpose.msra.mxu0 %v545
        %710 = vmatprep.subr.mxu0 0.0
        %711 = vmatpush1.xpose.msra.mxu0 %v548
        %712 = vmatprep.subr.mxu0 0.0
        %713 = vmatpush1.xpose.msra.mxu0 %v551
        %714 = vmatprep.subr.mxu0 0.0
        %715 = vmatpush1.xpose.msra.mxu0 %v554
        %716 = vmatprep.subr.mxu0 0.0
        %717 = vmatpush1.xpose.msra.mxu0 %v557
        %718 = vmatprep.subr.mxu0 0.0
        %719 = vmatpush1.xpose.msra.mxu0 %v560
        %720 = vmatprep.subr.mxu0 0.0
        %721 = vmatpush1.xpose.msra.mxu0 %v563
        %722 = vmatprep.subr.mxu0 0.0
        %723 = vmatpush1.xpose.msra.mxu0 %v566
        %724 = vmatprep.subr.mxu0 0.0
        %725 = vmatpush1.xpose.msra.mxu0 %v569
        %726 = vmatprep.subr.mxu0 0.0
        %727 = vmatpush1.xpose.msra.mxu0 %v572
        %728 = vmatprep.subr.mxu0 0.0
        %729 = vmatpush1.xpose.msra.mxu0 %v575
        %730 = vmatprep.mubr.f32.mxu0 0.0
        %731 = vmatmul.mubr.f32.gmra.mrb[0].mxu0 %v374
        %v732 = vpop.f32.mrb[0].mxu0
        %v733 = vadd.f32 %v355, %v732
        %v734 = vpop.f32.mrb[0].mxu0
        %v735 = vadd.f32 %v355, %v734
        %736 = vmatprep.mubr.f32.mxu0 0.0
        %737 = vmatmul.mubr.f32.gmra.mrb[0].mxu0 %v377
        %v738 = vpop.f32.mrb[0].mxu0
        %v739 = vadd.f32 %v360, %v738
        %v740 = vpop.f32.mrb[0].mxu0
        %v741 = vadd.f32 %v360, %v740
        %742 = vmatprep.mubr.f32.mxu0 0.0
        %743 = vmatmul.mubr.f32.gmra.mrb[0].mxu0 %v380
        %v744 = vpop.f32.mrb[0].mxu0
        %v745 = vadd.f32 %v365, %v744
        %v746 = vpop.f32.mrb[0].mxu0
        %v747 = vadd.f32 %v365, %v746
        %748 = vmatprep.mubr.f32.mxu0 0.0
        %749 = vmatmul.mubr.f32.gmra.mrb[0].mxu0 %v383
        %v750 = vpop.f32.mrb[0].mxu0
        %v751 = vadd.f32 %v370, %v750
        %v752 = vpop.f32.mrb[0].mxu0
        %v753 = vadd.f32 %v370, %v752
        %754 = vdwg.mxu0
        %v755 = vmax.f32 %v644, 0.0
        %v756 = vmax.f32 %v646, 0.0
        %v757 = vmax.f32 %v733, 0.0
        %v758 = vmax.f32 %v735, 0.0
        %v759 = vmax.f32 %v650, 0.0
        %v760 = vmax.f32 %v652, 0.0
        %v761 = vmax.f32 %v739, 0.0
        %v762 = vmax.f32 %v741, 0.0
        %v763 = vmax.f32 %v656, 0.0
        %v764 = vmax.f32 %v658, 0.0
        %v765 = vmax.f32 %v745, 0.0
        %v766 = vmax.f32 %v747, 0.0
        %v767 = vmax.f32 %v662, 0.0
        %v768 = vmax.f32 %v664, 0.0
        %v769 = vmax.f32 %v751, 0.0
        %v770 = vmax.f32 %v753, 0.0
        %v771 = vld [vmem:[%s3] sm:$0xff]
        %v772 = vld [vmem:[%s3 + $0x8] sm:$0xff]
        %v773 = vld [vmem:[%s3 + $0x10] sm:$0xff]
        %v774 = vld [vmem:[%s3 + $0x18] sm:$0xff]
        %v775 = vld [vmem:[%s4] sm:$0xff]
        %v776 = vld [vmem:[%s4 + $0x8] sm:$0xff]
        %v777 = vld [vmem:[%s4 + $0x10] sm:$0xff]
        %v778 = vld [vmem:[%s4 + $0x18] sm:$0xff]
        %780 = vset.pattern.permute.xlu0 0
        %781 = vperm.xlu0 %780, %v775
        %v782 = vpop.permute.xlu0 %781
        %785 = vset.pattern.permute.xlu0 0
        %786 = vperm.xlu0 %785, %v776
        %v787 = vpop.permute.xlu0 %786
        %790 = vset.pattern.permute.xlu0 0
        %791 = vperm.xlu0 %790, %v777
        %v792 = vpop.permute.xlu0 %791
        %795 = vset.pattern.permute.xlu0 0
        %796 = vperm.xlu0 %795, %v778
        %v797 = vpop.permute.xlu0 %796
        %vm799 = vcmask 261120
        %v801 = vsel %vm799, %v771, 0
        %v804 = vsel %vm799, %v772, 0
        %v807 = vsel %vm799, %v773, 0
        %v810 = vsel %vm799, %v774, 0
        %812 = vmatprep.subr.mxu0 %v756
        %813 = vmatpush1.msra.mxu0 %v755
        %814 = vmatprep.subr.mxu0 %v760
        %815 = vmatpush1.msra.mxu0 %v759
        %816 = vmatprep.subr.mxu0 %v764
        %817 = vmatpush1.msra.mxu0 %v763
        %818 = vmatprep.subr.mxu0 %v768
        %819 = vmatpush1.msra.mxu0 %v767
        %820 = vmatprep.subr.mxu0 0.0
        %821 = vmatpush1.msra.mxu0 0.0
        %822 = vmatprep.subr.mxu0 0.0
        %823 = vmatpush1.msra.mxu0 0.0
        %824 = vmatprep.subr.mxu0 0.0
        %825 = vmatpush1.msra.mxu0 0.0
        %826 = vmatprep.subr.mxu0 0.0
        %827 = vmatpush1.msra.mxu0 0.0
        %828 = vmatprep.subr.mxu0 0.0
        %829 = vmatpush1.msra.mxu0 0.0
        %830 = vmatprep.subr.mxu0 0.0
        %831 = vmatpush1.msra.mxu0 0.0
        %832 = vmatprep.subr.mxu0 0.0
        %833 = vmatpush1.msra.mxu0 0.0
        %834 = vmatprep.subr.mxu0 0.0
        %835 = vmatpush1.msra.mxu0 0.0
        %836 = vmatprep.subr.mxu0 0.0
        %837 = vmatpush1.msra.mxu0 0.0
        %838 = vmatprep.subr.mxu0 0.0
        %839 = vmatpush1.msra.mxu0 0.0
        %840 = vmatprep.subr.mxu0 0.0
        %841 = vmatpush1.msra.mxu0 0.0
        %842 = vmatprep.subr.mxu0 0.0
        %843 = vmatpush1.msra.mxu0 0.0
        %844 = vmatprep.subr.mxu0 0.0
        %845 = vmatpush1.msra.mxu0 0.0
        %846 = vmatprep.subr.mxu0 0.0
        %847 = vmatpush1.msra.mxu0 0.0
        %848 = vmatprep.subr.mxu0 0.0
        %849 = vmatpush1.msra.mxu0 0.0
        %850 = vmatprep.subr.mxu0 0.0
        %851 = vmatpush1.msra.mxu0 0.0
        %852 = vmatprep.subr.mxu0 0.0
        %853 = vmatpush1.msra.mxu0 0.0
        %854 = vmatprep.subr.mxu0 0.0
        %855 = vmatpush1.msra.mxu0 0.0
        %856 = vmatprep.subr.mxu0 0.0
        %857 = vmatpush1.msra.mxu0 0.0
        %858 = vmatprep.subr.mxu0 0.0
        %859 = vmatpush1.msra.mxu0 0.0
        %860 = vmatprep.subr.mxu0 0.0
        %861 = vmatpush1.msra.mxu0 0.0
        %862 = vmatprep.subr.mxu0 0.0
        %863 = vmatpush1.msra.mxu0 0.0
        %864 = vmatprep.subr.mxu0 0.0
        %865 = vmatpush1.msra.mxu0 0.0
        %866 = vmatprep.subr.mxu0 0.0
        %867 = vmatpush1.msra.mxu0 0.0
        %868 = vmatprep.subr.mxu0 0.0
        %869 = vmatpush1.msra.mxu0 0.0
        %870 = vmatprep.subr.mxu0 0.0
        %871 = vmatpush1.msra.mxu0 0.0
        %872 = vmatprep.subr.mxu0 0.0
        %873 = vmatpush1.msra.mxu0 0.0
        %874 = vmatprep.subr.mxu0 0.0
        %875 = vmatpush1.msra.mxu0 0.0
        %876 = vmatprep.mubr.f32.mxu0 0.0
        %877 = vmatmul.mubr.f32.gmra.mrb[0].mxu0 %v801
        %v878 = vpop.f32.mrb[0].mxu0
        %v879 = vadd.f32 %v782, %v878
        %v880 = vpop.f32.mrb[0].mxu0
        %v881 = vadd.f32 %v782, %v880
        %882 = vmatprep.mubr.f32.mxu0 0.0
        %883 = vmatmul.mubr.f32.gmra.mrb[0].mxu0 %v804
        %v884 = vpop.f32.mrb[0].mxu0
        %v885 = vadd.f32 %v787, %v884
        %v886 = vpop.f32.mrb[0].mxu0
        %v887 = vadd.f32 %v787, %v886
        %888 = vmatprep.mubr.f32.mxu0 0.0
        %889 = vmatmul.mubr.f32.gmra.mrb[0].mxu0 %v807
        %v890 = vpop.f32.mrb[0].mxu0
        %v891 = vadd.f32 %v792, %v890
        %v892 = vpop.f32.mrb[0].mxu0
        %v893 = vadd.f32 %v792, %v892
        %894 = vmatprep.mubr.f32.mxu0 0.0
        %895 = vmatmul.mubr.f32.gmra.mrb[0].mxu0 %v810
        %v896 = vpop.f32.mrb[0].mxu0
        %v897 = vadd.f32 %v797, %v896
        %v898 = vpop.f32.mrb[0].mxu0
        %v899 = vadd.f32 %v797, %v898
        %900 = vdwg.mxu0
        %901 = vmatprep.subr.mxu0 %v758
        %902 = vmatpush1.msra.mxu0 %v757
        %903 = vmatprep.subr.mxu0 %v762
        %904 = vmatpush1.msra.mxu0 %v761
        %905 = vmatprep.subr.mxu0 %v766
        %906 = vmatpush1.msra.mxu0 %v765
        %907 = vmatprep.subr.mxu0 %v770
        %908 = vmatpush1.msra.mxu0 %v769
        %909 = vmatprep.subr.mxu0 0.0
        %910 = vmatpush1.msra.mxu0 0.0
        %911 = vmatprep.subr.mxu0 0.0
        %912 = vmatpush1.msra.mxu0 0.0
        %913 = vmatprep.subr.mxu0 0.0
        %914 = vmatpush1.msra.mxu0 0.0
        %915 = vmatprep.subr.mxu0 0.0
        %916 = vmatpush1.msra.mxu0 0.0
        %917 = vmatprep.subr.mxu0 0.0
        %918 = vmatpush1.msra.mxu0 0.0
        %919 = vmatprep.subr.mxu0 0.0
        %920 = vmatpush1.msra.mxu0 0.0
        %921 = vmatprep.subr.mxu0 0.0
        %922 = vmatpush1.msra.mxu0 0.0
        %923 = vmatprep.subr.mxu0 0.0
        %924 = vmatpush1.msra.mxu0 0.0
        %925 = vmatprep.subr.mxu0 0.0
        %926 = vmatpush1.msra.mxu0 0.0
        %927 = vmatprep.subr.mxu0 0.0
        %928 = vmatpush1.msra.mxu0 0.0
        %929 = vmatprep.subr.mxu0 0.0
        %930 = vmatpush1.msra.mxu0 0.0
        %931 = vmatprep.subr.mxu0 0.0
        %932 = vmatpush1.msra.mxu0 0.0
        %933 = vmatprep.subr.mxu0 0.0
        %934 = vmatpush1.msra.mxu0 0.0
        %935 = vmatprep.subr.mxu0 0.0
        %936 = vmatpush1.msra.mxu0 0.0
        %937 = vmatprep.subr.mxu0 0.0
        %938 = vmatpush1.msra.mxu0 0.0
        %939 = vmatprep.subr.mxu0 0.0
        %940 = vmatpush1.msra.mxu0 0.0
        %941 = vmatprep.subr.mxu0 0.0
        %942 = vmatpush1.msra.mxu0 0.0
        %943 = vmatprep.subr.mxu0 0.0
        %944 = vmatpush1.msra.mxu0 0.0
        %945 = vmatprep.subr.mxu0 0.0
        %946 = vmatpush1.msra.mxu0 0.0
        %947 = vmatprep.subr.mxu0 0.0
        %948 = vmatpush1.msra.mxu0 0.0
        %949 = vmatprep.subr.mxu0 0.0
        %950 = vmatpush1.msra.mxu0 0.0
        %951 = vmatprep.subr.mxu0 0.0
        %952 = vmatpush1.msra.mxu0 0.0
        %953 = vmatprep.subr.mxu0 0.0
        %954 = vmatpush1.msra.mxu0 0.0
        %955 = vmatprep.subr.mxu0 0.0
        %956 = vmatpush1.msra.mxu0 0.0
        %957 = vmatprep.subr.mxu0 0.0
        %958 = vmatpush1.msra.mxu0 0.0
        %959 = vmatprep.subr.mxu0 0.0
        %960 = vmatpush1.msra.mxu0 0.0
        %961 = vmatprep.subr.mxu0 0.0
        %962 = vmatpush1.msra.mxu0 0.0
        %963 = vmatprep.subr.mxu0 0.0
        %964 = vmatpush1.msra.mxu0 0.0
        %965 = vmatprep.mubr.f32.mxu0 0.0
        %966 = vmatmul.mubr.f32.gmra.mrb[0].mxu0 %v801
        %v967 = vpop.f32.mrb[0].mxu0
        %v968 = vadd.f32 %v782, %v967
        %v969 = vpop.f32.mrb[0].mxu0
        %v970 = vadd.f32 %v782, %v969
        %971 = vmatprep.mubr.f32.mxu0 0.0
        %972 = vmatmul.mubr.f32.gmra.mrb[0].mxu0 %v804
        %v973 = vpop.f32.mrb[0].mxu0
        %v974 = vadd.f32 %v787, %v973
        %v975 = vpop.f32.mrb[0].mxu0
        %v976 = vadd.f32 %v787, %v975
        %977 = vmatprep.mubr.f32.mxu0 0.0
        %978 = vmatmul.mubr.f32.gmra.mrb[0].mxu0 %v807
        %v979 = vpop.f32.mrb[0].mxu0
        %v980 = vadd.f32 %v792, %v979
        %v981 = vpop.f32.mrb[0].mxu0
        %v982 = vadd.f32 %v792, %v981
        %983 = vmatprep.mubr.f32.mxu0 0.0
        %984 = vmatmul.mubr.f32.gmra.mrb[0].mxu0 %v810
        %v985 = vpop.f32.mrb[0].mxu0
        %v986 = vadd.f32 %v797, %v985
        %v987 = vpop.f32.mrb[0].mxu0
        %v988 = vadd.f32 %v797, %v987
        %989 = vdwg.mxu0
        %v990 = vmax.f32 %v879, 0.0
        %v991 = vmax.f32 %v881, 0.0
        %v992 = vmax.f32 %v968, 0.0
        %v993 = vmax.f32 %v970, 0.0
        %v994 = vmax.f32 %v885, 0.0
        %v995 = vmax.f32 %v887, 0.0
        %v996 = vmax.f32 %v974, 0.0
        %v997 = vmax.f32 %v976, 0.0
        %v998 = vmax.f32 %v891, 0.0
        %v999 = vmax.f32 %v893, 0.0
        %v1000 = vmax.f32 %v980, 0.0
        %v1001 = vmax.f32 %v982, 0.0
        %v1002 = vmax.f32 %v897, 0.0
        %v1003 = vmax.f32 %v899, 0.0
        %v1004 = vmax.f32 %v986, 0.0
        %v1005 = vmax.f32 %v988, 0.0
        %v1006 = vld [vmem:[%s5] sm:$0x3]
        %v1007 = vld [vmem:[%s6] sm:$0x3]
        %1009 = vset.pattern.permute.xlu0 0
        %1010 = vperm.xlu0 %1009, %v1007
        %v1011 = vpop.permute.xlu0 %1010
        %v1014 = vsel %vm799, %v1006, 0
        %1016 = vmatprep.subr.mxu0 %v991
        %1017 = vmatpush1.msra.mxu0 %v990
        %1018 = vmatprep.subr.mxu0 %v995
        %1019 = vmatpush1.msra.mxu0 %v994
        %1020 = vmatprep.subr.mxu0 %v999
        %1021 = vmatpush1.msra.mxu0 %v998
        %1022 = vmatprep.subr.mxu0 %v1003
        %1023 = vmatpush1.msra.mxu0 %v1002
        %1024 = vmatprep.subr.mxu0 0.0
        %1025 = vmatpush1.msra.mxu0 0.0
        %1026 = vmatprep.subr.mxu0 0.0
        %1027 = vmatpush1.msra.mxu0 0.0
        %1028 = vmatprep.subr.mxu0 0.0
        %1029 = vmatpush1.msra.mxu0 0.0
        %1030 = vmatprep.subr.mxu0 0.0
        %1031 = vmatpush1.msra.mxu0 0.0
        %1032 = vmatprep.subr.mxu0 0.0
        %1033 = vmatpush1.msra.mxu0 0.0
        %1034 = vmatprep.subr.mxu0 0.0
        %1035 = vmatpush1.msra.mxu0 0.0
        %1036 = vmatprep.subr.mxu0 0.0
        %1037 = vmatpush1.msra.mxu0 0.0
        %1038 = vmatprep.subr.mxu0 0.0
        %1039 = vmatpush1.msra.mxu0 0.0
        %1040 = vmatprep.subr.mxu0 0.0
        %1041 = vmatpush1.msra.mxu0 0.0
        %1042 = vmatprep.subr.mxu0 0.0
        %1043 = vmatpush1.msra.mxu0 0.0
        %1044 = vmatprep.subr.mxu0 0.0
        %1045 = vmatpush1.msra.mxu0 0.0
        %1046 = vmatprep.subr.mxu0 0.0
        %1047 = vmatpush1.msra.mxu0 0.0
        %1048 = vmatprep.subr.mxu0 0.0
        %1049 = vmatpush1.msra.mxu0 0.0
        %1050 = vmatprep.subr.mxu0 0.0
        %1051 = vmatpush1.msra.mxu0 0.0
        %1052 = vmatprep.subr.mxu0 0.0
        %1053 = vmatpush1.msra.mxu0 0.0
        %1054 = vmatprep.subr.mxu0 0.0
        %1055 = vmatpush1.msra.mxu0 0.0
        %1056 = vmatprep.subr.mxu0 0.0
        %1057 = vmatpush1.msra.mxu0 0.0
        %1058 = vmatprep.subr.mxu0 0.0
        %1059 = vmatpush1.msra.mxu0 0.0
        %1060 = vmatprep.subr.mxu0 0.0
        %1061 = vmatpush1.msra.mxu0 0.0
        %1062 = vmatprep.subr.mxu0 0.0
        %1063 = vmatpush1.msra.mxu0 0.0
        %1064 = vmatprep.subr.mxu0 0.0
        %1065 = vmatpush1.msra.mxu0 0.0
        %1066 = vmatprep.subr.mxu0 0.0
        %1067 = vmatpush1.msra.mxu0 0.0
        %1068 = vmatprep.subr.mxu0 0.0
        %1069 = vmatpush1.msra.mxu0 0.0
        %1070 = vmatprep.subr.mxu0 0.0
        %1071 = vmatpush1.msra.mxu0 0.0
        %1072 = vmatprep.subr.mxu0 0.0
        %1073 = vmatpush1.msra.mxu0 0.0
        %1074 = vmatprep.subr.mxu0 0.0
        %1075 = vmatpush1.msra.mxu0 0.0
        %1076 = vmatprep.subr.mxu0 0.0
        %1077 = vmatpush1.msra.mxu0 0.0
        %1078 = vmatprep.subr.mxu0 0.0
        %1079 = vmatpush1.msra.mxu0 0.0
        %1080 = vmatprep.mubr.f32.mxu0 0.0
        %1081 = vmatmul.mubr.f32.gmra.mrb[0].mxu0 %v1014
        %v1082 = vpop.f32.mrb[0].mxu0
        %v1083 = vadd.f32 %v1011, %v1082
        %v1084 = vpop.f32.mrb[0].mxu0
        %v1085 = vadd.f32 %v1011, %v1084
        %1086 = vdwg.mxu0
        %1087 = vmatprep.subr.mxu0 %v993
        %1088 = vmatpush1.msra.mxu0 %v992
        %1089 = vmatprep.subr.mxu0 %v997
        %1090 = vmatpush1.msra.mxu0 %v996
        %1091 = vmatprep.subr.mxu0 %v1001
        %1092 = vmatpush1.msra.mxu0 %v1000
        %1093 = vmatprep.subr.mxu0 %v1005
        %1094 = vmatpush1.msra.mxu0 %v1004
        %1095 = vmatprep.subr.mxu0 0.0
        %1096 = vmatpush1.msra.mxu0 0.0
        %1097 = vmatprep.subr.mxu0 0.0
        %1098 = vmatpush1.msra.mxu0 0.0
        %1099 = vmatprep.subr.mxu0 0.0
        %1100 = vmatpush1.msra.mxu0 0.0
        %1101 = vmatprep.subr.mxu0 0.0
        %1102 = vmatpush1.msra.mxu0 0.0
        %1103 = vmatprep.subr.mxu0 0.0
        %1104 = vmatpush1.msra.mxu0 0.0
        %1105 = vmatprep.subr.mxu0 0.0
        %1106 = vmatpush1.msra.mxu0 0.0
        %1107 = vmatprep.subr.mxu0 0.0
        %1108 = vmatpush1.msra.mxu0 0.0
        %1109 = vmatprep.subr.mxu0 0.0
        %1110 = vmatpush1.msra.mxu0 0.0
        %1111 = vmatprep.subr.mxu0 0.0
        %1112 = vmatpush1.msra.mxu0 0.0
        %1113 = vmatprep.subr.mxu0 0.0
        %1114 = vmatpush1.msra.mxu0 0.0
        %1115 = vmatprep.subr.mxu0 0.0
        %1116 = vmatpush1.msra.mxu0 0.0
        %1117 = vmatprep.subr.mxu0 0.0
        %1118 = vmatpush1.msra.mxu0 0.0
        %1119 = vmatprep.subr.mxu0 0.0
        %1120 = vmatpush1.msra.mxu0 0.0
        %1121 = vmatprep.subr.mxu0 0.0
        %1122 = vmatpush1.msra.mxu0 0.0
        %1123 = vmatprep.subr.mxu0 0.0
        %1124 = vmatpush1.msra.mxu0 0.0
        %1125 = vmatprep.subr.mxu0 0.0
        %1126 = vmatpush1.msra.mxu0 0.0
        %1127 = vmatprep.subr.mxu0 0.0
        %1128 = vmatpush1.msra.mxu0 0.0
        %1129 = vmatprep.subr.mxu0 0.0
        %1130 = vmatpush1.msra.mxu0 0.0
        %1131 = vmatprep.subr.mxu0 0.0
        %1132 = vmatpush1.msra.mxu0 0.0
        %1133 = vmatprep.subr.mxu0 0.0
        %1134 = vmatpush1.msra.mxu0 0.0
        %1135 = vmatprep.subr.mxu0 0.0
        %1136 = vmatpush1.msra.mxu0 0.0
        %1137 = vmatprep.subr.mxu0 0.0
        %1138 = vmatpush1.msra.mxu0 0.0
        %1139 = vmatprep.subr.mxu0 0.0
        %1140 = vmatpush1.msra.mxu0 0.0
        %1141 = vmatprep.subr.mxu0 0.0
        %1142 = vmatpush1.msra.mxu0 0.0
        %1143 = vmatprep.subr.mxu0 0.0
        %1144 = vmatpush1.msra.mxu0 0.0
        %1145 = vmatprep.subr.mxu0 0.0
        %1146 = vmatpush1.msra.mxu0 0.0
        %1147 = vmatprep.subr.mxu0 0.0
        %1148 = vmatpush1.msra.mxu0 0.0
        %1149 = vmatprep.subr.mxu0 0.0
        %1150 = vmatpush1.msra.mxu0 0.0
        %1151 = vmatprep.mubr.f32.mxu0 0.0
        %1152 = vmatmul.mubr.f32.gmra.mrb[0].mxu0 %v1014
        %v1153 = vpop.f32.mrb[0].mxu0
        %v1154 = vadd.f32 %v1011, %v1153
        %v1155 = vpop.f32.mrb[0].mxu0
        %v1156 = vadd.f32 %v1011, %v1155
        %1157 = vdwg.mxu0
        %v1162 = vcombine.low %v1083, %v1085
        %v1163 = vcombine.low %v1154, %v1156
        %v1165 = vunpack.c.l.s4 1983009808
        %v1166 = vunpack.c.0.s8 %v1165
        %v1167 = vlaneseq
        %v1168 = vshrl.u32 %v1167, 7
        %v1169 = vsub.s32 %v1166, %v1168
        %v1170 = vrot.slane %v1162, %v1169
        %v1172 = vunpack.c.l.s4 1983009808
        %v1173 = vunpack.c.0.s8 %v1172
        %v1174 = vlaneseq
        %v1175 = vshrl.u32 %v1174, 7
        %v1176 = vsub.s32 %v1173, %v1175
        %v1177 = vrot.slane %v1163, %v1176
        %v1178 = vcombine.low %v1170, %v1177
        %1180 = vst [vmem:[%s272] sm:$0xff] %v1178
        %s1181 = sand.u32 %s181, 1
        %s1182 = scalar_lea.sflag [#allocation3], %s1181
        %s1183 = sand.u32 %s181, 1
        %s1184 = smul.addr %s1183, 8
        %s1185 = scalar_lea.vmem [#allocation2], %s1184
        // Predicated region
        $region49: #{mlp_forward.1} parent=47 // pred_check
          %p1186 = pneg %p191
        $region50: #{mlp_forward.1} parent=47 // pred_check_branch
          %1188 = sbr.rel (%p1186) target = $region52
        $region51: #{mlp_forward.1} parent=47 // pred_region
          %s1189 = smul.u32 4, %s21
          %s1191 = ssub.s32 128, 128
          %1192 = vsyncadd %s1182, %s1191
          %s1193 = smul.addr %s1189, 32
          %s1194 = scalar_lea.hbm %s7, %s1193
          %s1196 = sshll.u32 %s1185, 4
          %s1197 = int_to_ptr.vmem [resolvable:$true] %s1196
          %1199 = dma.vmem_to_hbm [thread:$0]  %s1197, 128, %s1194, %s1182
        $region52: #{mlp_forward.1} parent=47 // pred_fallthru
          _
      $region48: #{mlp_forward.1} parent=5 // pred_fallthru
        _
      %p1200 = scmp.le.s32.totalorder 2, %s16
      // Predicated region
      $region53: #{mlp_forward.1} parent=5 // pred_check
        %p1201 = pneg %p1200
      $region54: #{mlp_forward.1} parent=5 // pred_check_branch
        %1203 = sbr.rel (%p1201) target = $region56
      $region55: #{mlp_forward.1} parent=5 // pred_region
        %s1204 = ssub.s32 %s16, 2
        // Predicated region
        $region57: #{mlp_forward.1} parent=55 // pred_check
          %p1205 = pneg %p197
        $region58: #{mlp_forward.1} parent=55 // pred_check_branch
          %1207 = sbr.rel (%p1205) target = $region60
        $region59: #{mlp_forward.1} parent=55 // pred_region
          %s1208 = sand.u32 %s182, 1
          %s1209 = scalar_lea.sflag [#allocation3], %s1208
          %s1210 = sand.u32 %s182, 1
          %s1211 = smul.addr %s1210, 8
          %s1212 = scalar_lea.vmem [#allocation2], %s1211
          %1213 = dma.done %s1209, 128
        $region60: #{mlp_forward.1} parent=55 // pred_fallthru
          _
      $region56: #{mlp_forward.1} parent=5 // pred_fallthru
        _
    $region6: #{mlp_forward.1} parent=1 // loop_footer
      %s20 = sadd.s32 1, %s16
    $region7: #{mlp_forward.1} parent=1 // loop_footer_branch
      %15 = sbr.rel target = $region3
    $region8: #{mlp_forward.1} parent=1 // loop_exit
      _
    %1214 = vsyncpa [#allocation3], 1
    %s1215 = scalar_lea.sflag [#allocation3], 1
    %1216 = vsyncpa %s1215, 1

</llo_original>
